<compile_context>
chip_gen: v7x
topology: tpu7x:2x2x1
jax: 0.10.0
libtpu: 0.0.40
codegen_flags: <defaults>
</compile_context>

<pallas_src>
import functools

import jax
import jax.numpy as jnp
from jax.experimental import pallas as pl
from jax.experimental.pallas import tpu as pltpu


_TB_CAP = 512       # max batch-tile rows (can be raised on v6e's 128 MiB VMEM)
_NEG_LARGE = -1e30  # plain Python float -> jaxpr literal, NOT a captured const


def _decision_kernel(pm_ref, x_ref, w_ref, b_ref, fold_ref, out_ref, *, S):
    """One grid step = one batch tile.  All agents' logits come from a single
    wide MXU matmul; the row's agent block is selected with a lane mask and
    compacted (fold-first) with a constant identity-stack matmul, so all
    softmax / argmax work is S-wide."""
    Sout = out_ref.shape[-1]             # round_up(S + 1, 128)

    x = x_ref[...]                       # (tb, F)    f32
    w = w_ref[...]                       # (F, ASp)   f32, all agents, zero-padded
    b = b_ref[...]                       # (1, ASp)   f32
    logits = jnp.dot(x, w, preferred_element_type=jnp.float32,
                     precision=jax.lax.Precision.HIGHEST) + b       # (tb, ASp)

    pm = pm_ref[...]                     # (tb, 2) int32: [lo = agent*S, mask]
    lo = pm[:, 0:1]                      # (tb, 1)
    active = pm[:, 1:2] != 0             # (tb, 1) bool

    # Zero everything outside the row's agent block, then compact the A blocks
    # down to S lanes with a constant block-stacked identity matmul (exact:
    # multiplies by 1.0/0.0 only).  Folding BEFORE the softmax keeps all the
    # exp/max/sum/select work S-wide instead of A*S-wide.
    col = jax.lax.broadcasted_iota(jnp.int32, logits.shape, 1)      # (tb, ASp)
    sel = jnp.logical_and(col >= lo, col < lo + S)
    masked0 = jnp.where(sel, logits, 0.0)
    sel_logits = jnp.dot(masked0, fold_ref[...],
                         preferred_element_type=jnp.float32,
                         precision=jax.lax.Precision.HIGHEST)       # (tb, Sout)

    # Masked, numerically stable softmax over the S valid lanes.
    ocol = jax.lax.broadcasted_iota(jnp.int32, sel_logits.shape, 1)  # (tb, Sout)
    valid = ocol < S
    masked = jnp.where(valid, sel_logits, _NEG_LARGE)
    m = jnp.max(masked, axis=-1, keepdims=True)                      # (tb, 1)
    e = jnp.exp(masked - m)                     # exactly 0 on invalid lanes
    denom = jnp.sum(e, axis=-1, keepdims=True)
    probs = e * pl.reciprocal(denom, approx=False)                   # (tb, Sout)

    # Greedy action = first-max index (matches torch.max tie-breaking).
    is_max = masked == m
    act = jnp.min(jnp.where(is_max, ocol, Sout), axis=-1, keepdims=True)

    # Lane-dense output slab: probs in lanes [0,S), action (as f32) in lane S,
    # zeros elsewhere; inactive rows fully zeroed (action 0, dist 0).
    slab = jnp.where(ocol == S, act.astype(jnp.float32), probs)
    out_ref[...] = jnp.where(active, slab, 0.0)


def _round_up(x, m):
    return (x + m - 1) // m * m


def _cdiv(a, b):
    return -(-a // b)


@jax.jit
def decision_forward(xs, prior_actions, mask, weights, biases):
    """xs: (B, F) f32; prior_actions, mask: (B,) int;
    weights: (A, F, S) f32 (nn.Linear weight pre-transposed); biases: (A, S).
    Returns (ys, actions, are_exp, dists) mirroring Decision.forward outputs
    (ys, actions) plus the per-row meta tensors (are_exp, dists)."""
    B, F = xs.shape
    A, _, S = weights.shape
    AS = A * S
    ASp = _round_up(AS, 128)            # lane-align the wide matmul's N dim
    Sout = _round_up(S + 1, 128)        # dist lanes [0,S), action lane S, pad

    # Per-row agent selection scalars: lo = clamp(prior_action)*S, activity.
    pa = jnp.clip(prior_actions.astype(jnp.int32), 0, A - 1)
    pm = jnp.stack([pa * S, mask.astype(jnp.int32)], axis=1)        # (B, 2)

    # Wide layout: one (F, ASp) matrix so a single matmul covers all agents;
    # padded columns are zero and never selected by the lane mask.
    w_wide = jnp.transpose(weights, (1, 0, 2)).reshape(F, AS)
    w_wide = jnp.pad(w_wide, ((0, 0), (0, ASp - AS)))
    b_wide = jnp.pad(biases.reshape(1, AS), ((0, 0), (0, ASp - AS)))
    # Block-stacked identity fold matrix: fold[i, j] = (i % S == j), zero pad.
    fold = jnp.pad(jnp.tile(jnp.eye(S, dtype=jnp.float32), (A, 1)),
                   ((0, ASp - AS), (0, Sout - S)))                   # (ASp, Sout)

    # Balanced batch tiles; >=2 grid steps once there is enough work so the
    # "parallel" axis shards across both TensorCores on v7x.
    n_tiles = max(1, _cdiv(B, _TB_CAP))
    if B >= 64:
        n_tiles = max(n_tiles, 2)
    tb = _round_up(_cdiv(B, n_tiles), 8)
    Bp = _round_up(B, tb)
    pad = Bp - B
    xs_p = jnp.pad(xs, ((0, pad), (0, 0)))
    pm_p = jnp.pad(pm, ((0, pad), (0, 0)))     # padded rows: mask=0 -> zeroed

    slab = pl.pallas_call(
        functools.partial(_decision_kernel, S=S),
        out_shape=jax.ShapeDtypeStruct((Bp, Sout), jnp.float32),
        grid_spec=pltpu.PrefetchScalarGridSpec(
            num_scalar_prefetch=0,
            grid=(Bp // tb,),
            in_specs=[
                pl.BlockSpec((tb, 2), lambda i: (i, 0)),       # [lo, mask]
                pl.BlockSpec((tb, F), lambda i: (i, 0)),       # xs tile
                pl.BlockSpec((F, ASp), lambda i: (0, 0)),      # wide weights
                pl.BlockSpec((1, ASp), lambda i: (0, 0)),      # wide bias
                pl.BlockSpec((ASp, Sout), lambda i: (0, 0)),   # fold matrix
            ],
            out_specs=pl.BlockSpec((tb, Sout), lambda i: (i, 0)),
        ),
        compiler_params=pltpu.CompilerParams(
            dimension_semantics=("parallel",)),
    )(pm_p, xs_p, w_wide, b_wide, fold)

    ys = xs                                     # passthrough clone of xs
    dist = slab[:B, :S]
    actions = slab[:B, S].astype(jnp.int32)     # exact: small non-negative ints
    # Greedy selection -> exploratory flag equals the activity mask.
    # TODO(synk): if the policy storage is ever stochastic, are_exp must be
    #             recomputed as (argmax(dist) == sampled_action).
    are_exp = (mask != 0).astype(jnp.int32)
    # (B, num_selections, 5) with only column 0 populated (d.size(-1) == 1);
    # built with a pad instead of a scatter.
    dists = jnp.pad(dist[:, :, None], ((0, 0), (0, 0), (0, 4)))
    return ys, actions, are_exp, dists


def reference_forward(xs, prior_actions, mask, weights, biases):
    """Pure-JAX reference mirroring the PyTorch loop, for a sanity check."""
    B, F = xs.shape
    A, _, S = weights.shape
    logits = jnp.einsum('bf,afs->abs', xs, weights,
                        precision='highest') + biases[:, None, :]    # (A,B,S)
    probs = jax.nn.softmax(logits, axis=-1)
    amax = jnp.argmax(logits, axis=-1).astype(jnp.int32)             # (A,B)
    pa = jnp.clip(prior_actions, 0, A - 1)
    sel = probs[pa, jnp.arange(B)]                                   # (B,S)
    act = amax[pa, jnp.arange(B)]                                    # (B,)
    active = mask != 0
    dist = jnp.where(active[:, None], sel, 0.0)
    act = jnp.where(active, act, 0)
    exp = jnp.where(active, 1, 0).astype(jnp.int32)
    dists = jnp.zeros((B, S, 5), jnp.float32).at[:, :, 0].set(dist)
    return xs, act, exp, dists


if __name__ == "__main__":
    key = jax.random.PRNGKey(0)
    k_x, k_w, k_b, k_pa = jax.random.split(key, 4)

    B, F, S, A = 8, 32, 16, 2   # batch, in_features, num_selections, num_agents

    xs = jax.random.normal(k_x, (B, F), dtype=jnp.float32)
    # Deterministic "Linear" params per agent (nn.Linear(F, S) weight is (S,F);
    # stored pre-transposed as (A, F, S) for the kernel).
    weights = 0.1 * jax.random.normal(k_w, (A, F, S), dtype=jnp.float32)
    biases = 0.1 * jax.random.normal(k_b, (A, S), dtype=jnp.float32)
    prior_actions = jax.random.randint(k_pa, (B,), 0, A, dtype=jnp.int32)
    mask = jnp.array([1, 1, 0, 1, 1, 1, 0, 1], dtype=jnp.int32)

    ys, actions, are_exp, dists = decision_forward(
        xs, prior_actions, mask, weights, biases)
    jax.block_until_ready((ys, actions, are_exp, dists))

    ys_r, act_r, exp_r, dists_r = reference_forward(
        xs, prior_actions, mask, weights, biases)

    assert jnp.allclose(ys, ys_r)
    assert jnp.array_equal(actions, act_r)
    assert jnp.array_equal(are_exp, exp_r)
    assert jnp.allclose(dists, dists_r, atol=1e-5)

    print("KERNEL_OK")
</pallas_src>

<mosaic_0001>
module attributes {stable_mosaic.version = 11 : i64} {
  func.func @_decision_kernel(%arg0: i32, %arg1: memref<8x2xi32, #tpu.memory_space<vmem>>, %arg2: memref<8x32xf32, #tpu.memory_space<vmem>>, %arg3: memref<32x128xf32, #tpu.memory_space<vmem>>, %arg4: memref<1x128xf32, #tpu.memory_space<vmem>>, %arg5: memref<128x128xf32, #tpu.memory_space<vmem>>, %arg6: memref<8x128xf32, #tpu.memory_space<vmem>>) attributes {dimension_semantics = [#tpu.dimension_semantics<parallel>], iteration_bounds = array<i64: 1>, scalar_prefetch = 0 : i64, scratch_operands = 0 : i64, tpu.core_type = #tpu.core_type<tc>, window_params = [{transform_indices = @transform_0, window_bounds = array<i64: 8, 2>}, {transform_indices = @transform_1, window_bounds = array<i64: 8, 32>}, {pipeline_mode = #tpu.pipeline_mode<synchronous>, transform_indices = @transform_2, window_bounds = array<i64: 32, 128>}, {pipeline_mode = #tpu.pipeline_mode<synchronous>, transform_indices = @transform_3, window_bounds = array<i64: 1, 128>}, {pipeline_mode = #tpu.pipeline_mode<synchronous>, transform_indices = @transform_4, window_bounds = array<i64: 128, 128>}, {transform_indices = @transform_5, window_bounds = array<i64: 8, 128>}]} {
    %c0 = arith.constant 0 : index
    %c0_0 = arith.constant 0 : index
    %0 = vector.load %arg2[%c0, %c0_0] : memref<8x32xf32, #tpu.memory_space<vmem>>, vector<8x32xf32>
    %c0_1 = arith.constant 0 : index
    %c0_2 = arith.constant 0 : index
    %1 = vector.load %arg3[%c0_1, %c0_2] : memref<32x128xf32, #tpu.memory_space<vmem>>, vector<32x128xf32>
    %c0_3 = arith.constant 0 : index
    %c0_4 = arith.constant 0 : index
    %2 = vector.load %arg4[%c0_3, %c0_4] : memref<1x128xf32, #tpu.memory_space<vmem>>, vector<1x128xf32>
    %cst = arith.constant dense<0.000000e+00> : vector<8x128xf32>
    %3 = tpu.matmul %0, %1, %cst {dimension_numbers = #tpu.dot_dimension_numbers<[1], [0], [0], [1], [0, 0, 1, 1], [], []>, precision = #tpu.contract_precision<fp32>} : vector<8x32xf32>, vector<32x128xf32>, vector<8x128xf32> -> vector<8x128xf32>
    %4 = vector.broadcast %2 : vector<1x128xf32> to vector<8x128xf32>
    %5 = arith.addf %3, %4 : vector<8x128xf32>
    %c0_5 = arith.constant 0 : index
    %c0_6 = arith.constant 0 : index
    %6 = vector.load %arg1[%c0_5, %c0_6] : memref<8x2xi32, #tpu.memory_space<vmem>>, vector<8x2xi32>
    %7 = vector.extract_strided_slice %6 {offsets = [0, 0], sizes = [8, 1], strides = [1, 1]} : vector<8x2xi32> to vector<8x1xi32>
    %8 = vector.extract_strided_slice %6 {offsets = [0, 1], sizes = [8, 1], strides = [1, 1]} : vector<8x2xi32> to vector<8x1xi32>
    %c0_i32 = arith.constant 0 : i32
    %9 = vector.broadcast %c0_i32 : i32 to vector<8x1xi32>
    %10 = arith.cmpi ne, %8, %9 : vector<8x1xi32>
    %11 = tpu.iota {dimensions = array<i32: 1>} : vector<8x128xi32>
    %12 = vector.broadcast %7 : vector<8x1xi32> to vector<8x128xi32>
    %13 = arith.cmpi sge, %11, %12 : vector<8x128xi32>
    %c16_i32 = arith.constant 16 : i32
    %14 = vector.broadcast %c16_i32 : i32 to vector<8x1xi32>
    %15 = arith.addi %7, %14 : vector<8x1xi32>
    %16 = vector.broadcast %15 : vector<8x1xi32> to vector<8x128xi32>
    %17 = arith.cmpi slt, %11, %16 : vector<8x128xi32>
    %18 = arith.andi %13, %17 : vector<8x128xi1>
    %cst_7 = arith.constant 0.000000e+00 : f32
    %19 = vector.broadcast %cst_7 : f32 to vector<8x128xf32>
    %20 = arith.select %18, %5, %19 : vector<8x128xi1>, vector<8x128xf32>
    %c0_8 = arith.constant 0 : index
    %c0_9 = arith.constant 0 : index
    %21 = vector.load %arg5[%c0_8, %c0_9] : memref<128x128xf32, #tpu.memory_space<vmem>>, vector<128x128xf32>
    %cst_10 = arith.constant dense<0.000000e+00> : vector<8x128xf32>
    %22 = tpu.matmul %20, %21, %cst_10 {dimension_numbers = #tpu.dot_dimension_numbers<[1], [0], [0], [1], [0, 0, 1, 1], [], []>, precision = #tpu.contract_precision<fp32>} : vector<8x128xf32>, vector<128x128xf32>, vector<8x128xf32> -> vector<8x128xf32>
    %23 = tpu.iota {dimensions = array<i32: 1>} : vector<8x128xi32>
    %c16_i32_11 = arith.constant 16 : i32
    %24 = vector.broadcast %c16_i32_11 : i32 to vector<8x128xi32>
    %25 = arith.cmpi slt, %23, %24 : vector<8x128xi32>
    %cst_12 = arith.constant -1.000000e+30 : f32
    %26 = vector.broadcast %cst_12 : f32 to vector<8x128xf32>
    %27 = arith.select %25, %22, %26 : vector<8x128xi1>, vector<8x128xf32>
    %cst_13 = arith.constant dense<0xFF800000> : vector<8xf32>
    %28 = vector.multi_reduction <maximumf>, %27, %cst_13 [1] : vector<8x128xf32> to vector<8xf32>
    %29 = vector.shape_cast %28 : vector<8xf32> to vector<8x1xf32>
    %30 = vector.broadcast %29 : vector<8x1xf32> to vector<8x128xf32>
    %31 = arith.subf %27, %30 : vector<8x128xf32>
    %32 = math.exp %31 : vector<8x128xf32>
    %cst_14 = arith.constant dense<0.000000e+00> : vector<8xf32>
    %33 = vector.multi_reduction <add>, %32, %cst_14 [1] : vector<8x128xf32> to vector<8xf32>
    %34 = vector.shape_cast %33 : vector<8xf32> to vector<8x1xf32>
    %35 = tpu.reciprocal %34 : vector<8x1xf32> -> vector<8x1xf32>
    %36 = vector.broadcast %35 : vector<8x1xf32> to vector<8x128xf32>
    %37 = arith.mulf %32, %36 : vector<8x128xf32>
    %38 = vector.broadcast %29 : vector<8x1xf32> to vector<8x128xf32>
    %39 = arith.cmpf oeq, %27, %38 : vector<8x128xf32>
    %c128_i32 = arith.constant 128 : i32
    %40 = vector.broadcast %c128_i32 : i32 to vector<8x128xi32>
    %41 = arith.select %39, %23, %40 : vector<8x128xi1>, vector<8x128xi32>
    %cst_15 = arith.constant dense<2147483647> : vector<8xi32>
    %42 = vector.multi_reduction <minsi>, %41, %cst_15 [1] : vector<8x128xi32> to vector<8xi32>
    %43 = vector.shape_cast %42 : vector<8xi32> to vector<8x1xi32>
    %c16_i32_16 = arith.constant 16 : i32
    %44 = vector.broadcast %c16_i32_16 : i32 to vector<8x128xi32>
    %45 = arith.cmpi eq, %23, %44 : vector<8x128xi32>
    %46 = arith.sitofp %43 : vector<8x1xi32> to vector<8x1xf32>
    %47 = vector.shape_cast %46 : vector<8x1xf32> to vector<8x1xf32>
    %48 = vector.broadcast %47 : vector<8x1xf32> to vector<8x128xf32>
    %49 = arith.select %45, %48, %37 : vector<8x128xi1>, vector<8x128xf32>
    %cst_17 = arith.constant 0.000000e+00 : f32
    %50 = vector.shape_cast %10 : vector<8x1xi1> to vector<8x1xi1>
    %51 = vector.broadcast %50 : vector<8x1xi1> to vector<8x128xi1>
    %52 = vector.broadcast %cst_17 : f32 to vector<8x128xf32>
    %53 = arith.select %51, %49, %52 : vector<8x128xi1>, vector<8x128xf32>
    %c0_18 = arith.constant 0 : index
    %c0_19 = arith.constant 0 : index
    %54 = vector.load %arg6[%c0_18, %c0_19] : memref<8x128xf32, #tpu.memory_space<vmem>>, vector<8x128xf32>
    tpu.vector_store %arg6[%c0_18, %c0_19], %53 {strides = array<i32>} : memref<8x128xf32, #tpu.memory_space<vmem>>, vector<8x128xf32>,
    return
  }
  func.func @transform_0(%arg0: i32) -> (i32, i32) {
    %c0_i32 = arith.constant 0 : i32
    %c0_i32_0 = arith.constant 0 : i32
    return %arg0, %c0_i32 : i32, i32
  }
  func.func @transform_1(%arg0: i32) -> (i32, i32) {
    %c0_i32 = arith.constant 0 : i32
    %c0_i32_0 = arith.constant 0 : i32
    return %arg0, %c0_i32 : i32, i32
  }
  func.func @transform_2(%arg0: i32) -> (i32, i32) {
    %c0_i32 = arith.constant 0 : i32
    %c0_i32_0 = arith.constant 0 : i32
    %c0_i32_1 = arith.constant 0 : i32
    return %c0_i32, %c0_i32_0 : i32, i32
  }
  func.func @transform_3(%arg0: i32) -> (i32, i32) {
    %c0_i32 = arith.constant 0 : i32
    %c0_i32_0 = arith.constant 0 : i32
    %c0_i32_1 = arith.constant 0 : i32
    return %c0_i32, %c0_i32_0 : i32, i32
  }
  func.func @transform_4(%arg0: i32) -> (i32, i32) {
    %c0_i32 = arith.constant 0 : i32
    %c0_i32_0 = arith.constant 0 : i32
    %c0_i32_1 = arith.constant 0 : i32
    return %c0_i32, %c0_i32_0 : i32, i32
  }
  func.func @transform_5(%arg0: i32) -> (i32, i32) {
    %c0_i32 = arith.constant 0 : i32
    %c0_i32_0 = arith.constant 0 : i32
    return %arg0, %c0_i32 : i32, i32
  }
}

</mosaic_0001>

<llo_original>
// kernel: decision_forward.1
$region0: #{decision_forward.1}
  #allocation0 [shape = 'u32[]', space=smem, size = 0x4, offset = 0x4, fixed_abs, tag = 'smem constant byte address 0x4 - core index']
  #allocation1 [shape = 'u32[144,128]{1,0:T(1,128)}', space=vmem, size = 0x12000, scoped, tag = 'internal scratch']
  %s0 = inlined_call_operand.vmem [shape: s32[8,2], index: 0, kind: input, shape index: {}]
  %s1 = inlined_call_operand.vmem [shape: f32[8,32], index: 1, kind: input, shape index: {}]
  %s2 = inlined_call_operand.vmem [shape: f32[32,128], index: 2, kind: input, shape index: {}]
  %s3 = inlined_call_operand.vmem [shape: f32[1,128], index: 3, kind: input, shape index: {}]
  %s4 = inlined_call_operand.vmem [shape: f32[128,128], index: 4, kind: input, shape index: {}]
  %s5 = inlined_call_operand.vmem [shape: f32[8,128], index: 5, kind: output, shape index: {}]
  %s6 = sld [smem:[#allocation0]]
  $region30: #{decision_forward.1} parent=0
    _
  %s8 = ssub.s32 1, %s6
  %s9 = scalar_select 0, %s8, %s6
  // Predicated region
  $region2: #{decision_forward.1} parent=0 // pred_check
    _
  $region3: #{decision_forward.1} parent=0 // pred_check_branch
    %11 = sbr.rel (0) target = $region5
  $region4: #{decision_forward.1} parent=0 // pred_region
    _
  $region5: #{decision_forward.1} parent=0 // pred_fallthru
    _
  // Predicated region
  $region6: #{decision_forward.1} parent=0 // pred_check
    _
  $region7: #{decision_forward.1} parent=0 // pred_check_branch
    %13 = sbr.rel (0) target = $region9
  $region8: #{decision_forward.1} parent=0 // pred_region
    _
  $region9: #{decision_forward.1} parent=0 // pred_fallthru
    _
  // Predicated region
  $region10: #{decision_forward.1} parent=0 // pred_check
    _
  $region11: #{decision_forward.1} parent=0 // pred_check_branch
    %15 = sbr.rel (0) target = $region13
  $region12: #{decision_forward.1} parent=0 // pred_region
    _
  $region13: #{decision_forward.1} parent=0 // pred_fallthru
    _
  // Predicated region
  $region14: #{decision_forward.1} parent=0 // pred_check
    _
  $region15: #{decision_forward.1} parent=0 // pred_check_branch
    %17 = sbr.rel (0) target = $region17
  $region16: #{decision_forward.1} parent=0 // pred_region
    _
  $region17: #{decision_forward.1} parent=0 // pred_fallthru
    _
  // Predicated region
  $region18: #{decision_forward.1} parent=0 // pred_check
    _
  $region19: #{decision_forward.1} parent=0 // pred_check_branch
    %19 = sbr.rel (0) target = $region21
  $region20: #{decision_forward.1} parent=0 // pred_region
    _
  $region21: #{decision_forward.1} parent=0 // pred_fallthru
    _
  %v20 = vld [vmem:[%s1] sm:$0xff]
  %v21 = vld [vmem:[%s2] sm:$0xff]
  %v22 = vld [vmem:[%s2 + $0x8] sm:$0xff]
  %v23 = vld [vmem:[%s2 + $0x10] sm:$0xff]
  %v24 = vld [vmem:[%s2 + $0x18] sm:$0xff]
  %v25 = vld [vmem:[%s3] sm:$0x1]
  %v27 = vlaneseq
  %v28 = vshrl.u32 %v27, 7
  %v29 = vsub.s32 0, %v28
  %v30 = vrot.slane %v25, %v29
  %vm32 = vcmask 261120
  %v34 = vsel %vm32, %v20, 0
  %36 = vmatprep.subr.mxu0 0.0
  %v37 = vand.u32 %v21, 4294901760
  %38 = vmatpush1.msra.mxu0 %v37
  %39 = vmatprep.subr.mxu0 0.0
  %v40 = vand.u32 %v22, 4294901760
  %41 = vmatpush1.msra.mxu0 %v40
  %42 = vmatprep.subr.mxu0 0.0
  %v43 = vand.u32 %v23, 4294901760
  %44 = vmatpush1.msra.mxu0 %v43
  %45 = vmatprep.subr.mxu0 0.0
  %v46 = vand.u32 %v24, 4294901760
  %47 = vmatpush1.msra.mxu0 %v46
  %48 = vmatprep.subr.mxu0 0.0
  %49 = vmatpush1.msra.mxu0 0.0
  %50 = vmatprep.subr.mxu0 0.0
  %51 = vmatpush1.msra.mxu0 0.0
  %52 = vmatprep.subr.mxu0 0.0
  %53 = vmatpush1.msra.mxu0 0.0
  %54 = vmatprep.subr.mxu0 0.0
  %55 = vmatpush1.msra.mxu0 0.0
  %56 = vmatprep.subr.mxu0 0.0
  %57 = vmatpush1.msra.mxu0 0.0
  %58 = vmatprep.subr.mxu0 0.0
  %59 = vmatpush1.msra.mxu0 0.0
  %60 = vmatprep.subr.mxu0 0.0
  %61 = vmatpush1.msra.mxu0 0.0
  %62 = vmatprep.subr.mxu0 0.0
  %63 = vmatpush1.msra.mxu0 0.0
  %64 = vmatprep.subr.mxu0 0.0
  %65 = vmatpush1.msra.mxu0 0.0
  %66 = vmatprep.subr.mxu0 0.0
  %67 = vmatpush1.msra.mxu0 0.0
  %68 = vmatprep.subr.mxu0 0.0
  %69 = vmatpush1.msra.mxu0 0.0
  %70 = vmatprep.subr.mxu0 0.0
  %71 = vmatpush1.msra.mxu0 0.0
  %72 = vmatprep.subr.mxu0 0.0
  %73 = vmatpush1.msra.mxu0 0.0
  %74 = vmatprep.subr.mxu0 0.0
  %75 = vmatpush1.msra.mxu0 0.0
  %76 = vmatprep.subr.mxu0 0.0
  %77 = vmatpush1.msra.mxu0 0.0
  %78 = vmatprep.subr.mxu0 0.0
  %79 = vmatpush1.msra.mxu0 0.0
  %80 = vmatprep.subr.mxu0 0.0
  %81 = vmatpush1.msra.mxu0 0.0
  %82 = vmatprep.subr.mxu0 0.0
  %83 = vmatpush1.msra.mxu0 0.0
  %84 = vmatprep.subr.mxu0 0.0
  %85 = vmatpush1.msra.mxu0 0.0
  %86 = vmatprep.subr.mxu0 0.0
  %87 = vmatpush1.msra.mxu0 0.0
  %88 = vmatprep.subr.mxu0 0.0
  %89 = vmatpush1.msra.mxu0 0.0
  %90 = vmatprep.subr.mxu0 0.0
  %91 = vmatpush1.msra.mxu0 0.0
  %92 = vmatprep.subr.mxu0 0.0
  %93 = vmatpush1.msra.mxu0 0.0
  %94 = vmatprep.subr.mxu0 0.0
  %95 = vmatpush1.msra.mxu0 0.0
  %96 = vmatprep.subr.mxu0 0.0
  %97 = vmatpush1.msra.mxu0 0.0
  %98 = vmatprep.subr.mxu0 0.0
  %99 = vmatpush1.msra.mxu0 0.0
  %100 = vmatprep.subr.mxu0 0.0
  %101 = vmatpush1.msra.mxu0 0.0
  %102 = vmatprep.subr.mxu0 0.0
  %103 = vmatpush1.msra.mxu0 0.0
  %104 = vmatprep.mubr.f32.mxu0 0.0
  %v105 = vand.u32 %v34, 4294901760
  %v106 = vsub.f32 %v34, %v105
  %v107 = vand.u32 %v106, 4294901760
  %v108 = vsub.f32 %v106, %v107
  %v109 = vand.u32 %v108, 4294901760
  %110 = vmatmul.mubr.f32.gmra.mrb[0].mxu0 %v109
  %v111 = vpop.f32.mrb[0].mxu0
  %v112 = vadd.f32 %v30, %v111
  %v113 = vpop.f32.mrb[0].mxu0
  %114 = vdwg.mxu0
  %115 = vmatprep.subr.mxu0 0.0
  %v116 = vand.u32 %v21, 4294901760
  %v117 = vsub.f32 %v21, %v116
  %v118 = vand.u32 %v117, 4294901760
  %v119 = vsub.f32 %v117, %v118
  %v120 = vand.u32 %v119, 4294901760
  %121 = vmatpush1.msra.mxu0 %v120
  %122 = vmatprep.subr.mxu0 0.0
  %v123 = vand.u32 %v22, 4294901760
  %v124 = vsub.f32 %v22, %v123
  %v125 = vand.u32 %v124, 4294901760
  %v126 = vsub.f32 %v124, %v125
  %v127 = vand.u32 %v126, 4294901760
  %128 = vmatpush1.msra.mxu0 %v127
  %129 = vmatprep.subr.mxu0 0.0
  %v130 = vand.u32 %v23, 4294901760
  %v131 = vsub.f32 %v23, %v130
  %v132 = vand.u32 %v131, 4294901760
  %v133 = vsub.f32 %v131, %v132
  %v134 = vand.u32 %v133, 4294901760
  %135 = vmatpush1.msra.mxu0 %v134
  %136 = vmatprep.subr.mxu0 0.0
  %v137 = vand.u32 %v24, 4294901760
  %v138 = vsub.f32 %v24, %v137
  %v139 = vand.u32 %v138, 4294901760
  %v140 = vsub.f32 %v138, %v139
  %v141 = vand.u32 %v140, 4294901760
  %142 = vmatpush1.msra.mxu0 %v141
  %143 = vmatprep.subr.mxu0 0.0
  %144 = vmatpush1.msra.mxu0 0.0
  %145 = vmatprep.subr.mxu0 0.0
  %146 = vmatpush1.msra.mxu0 0.0
  %147 = vmatprep.subr.mxu0 0.0
  %148 = vmatpush1.msra.mxu0 0.0
  %149 = vmatprep.subr.mxu0 0.0
  %150 = vmatpush1.msra.mxu0 0.0
  %151 = vmatprep.subr.mxu0 0.0
  %152 = vmatpush1.msra.mxu0 0.0
  %153 = vmatprep.subr.mxu0 0.0
  %154 = vmatpush1.msra.mxu0 0.0
  %155 = vmatprep.subr.mxu0 0.0
  %156 = vmatpush1.msra.mxu0 0.0
  %157 = vmatprep.subr.mxu0 0.0
  %158 = vmatpush1.msra.mxu0 0.0
  %159 = vmatprep.subr.mxu0 0.0
  %160 = vmatpush1.msra.mxu0 0.0
  %161 = vmatprep.subr.mxu0 0.0
  %162 = vmatpush1.msra.mxu0 0.0
  %163 = vmatprep.subr.mxu0 0.0
  %164 = vmatpush1.msra.mxu0 0.0
  %165 = vmatprep.subr.mxu0 0.0
  %166 = vmatpush1.msra.mxu0 0.0
  %167 = vmatprep.subr.mxu0 0.0
  %168 = vmatpush1.msra.mxu0 0.0
  %169 = vmatprep.subr.mxu0 0.0
  %170 = vmatpush1.msra.mxu0 0.0
  %171 = vmatprep.subr.mxu0 0.0
  %172 = vmatpush1.msra.mxu0 0.0
  %173 = vmatprep.subr.mxu0 0.0
  %174 = vmatpush1.msra.mxu0 0.0
  %175 = vmatprep.subr.mxu0 0.0
  %176 = vmatpush1.msra.mxu0 0.0
  %177 = vmatprep.subr.mxu0 0.0
  %178 = vmatpush1.msra.mxu0 0.0
  %179 = vmatprep.subr.mxu0 0.0
  %180 = vmatpush1.msra.mxu0 0.0
  %181 = vmatprep.subr.mxu0 0.0
  %182 = vmatpush1.msra.mxu0 0.0
  %183 = vmatprep.subr.mxu0 0.0
  %184 = vmatpush1.msra.mxu0 0.0
  %185 = vmatprep.subr.mxu0 0.0
  %186 = vmatpush1.msra.mxu0 0.0
  %187 = vmatprep.subr.mxu0 0.0
  %188 = vmatpush1.msra.mxu0 0.0
  %189 = vmatprep.subr.mxu0 0.0
  %190 = vmatpush1.msra.mxu0 0.0
  %191 = vmatprep.subr.mxu0 0.0
  %192 = vmatpush1.msra.mxu0 0.0
  %193 = vmatprep.subr.mxu0 0.0
  %194 = vmatpush1.msra.mxu0 0.0
  %195 = vmatprep.subr.mxu0 0.0
  %196 = vmatpush1.msra.mxu0 0.0
  %197 = vmatprep.subr.mxu0 0.0
  %198 = vmatpush1.msra.mxu0 0.0
  %199 = vmatprep.mubr.f32.mxu0 0.0
  %v200 = vand.u32 %v34, 4294901760
  %201 = vmatmul.mubr.f32.gmra.mrb[0].mxu0 %v200
  %v202 = vpop.f32.mrb[0].mxu0
  %v203 = vadd.f32 %v112, %v202
  %v204 = vpop.f32.mrb[0].mxu0
  %205 = vdwg.mxu0
  %206 = vmatprep.subr.mxu0 0.0
  %v207 = vand.u32 %v21, 4294901760
  %v208 = vsub.f32 %v21, %v207
  %209 = vmatpush1.msra.mxu0 %v208
  %210 = vmatprep.subr.mxu0 0.0
  %v211 = vand.u32 %v22, 4294901760
  %v212 = vsub.f32 %v22, %v211
  %213 = vmatpush1.msra.mxu0 %v212
  %214 = vmatprep.subr.mxu0 0.0
  %v215 = vand.u32 %v23, 4294901760
  %v216 = vsub.f32 %v23, %v215
  %217 = vmatpush1.msra.mxu0 %v216
  %218 = vmatprep.subr.mxu0 0.0
  %v219 = vand.u32 %v24, 4294901760
  %v220 = vsub.f32 %v24, %v219
  %221 = vmatpush1.msra.mxu0 %v220
  %222 = vmatprep.subr.mxu0 0.0
  %223 = vmatpush1.msra.mxu0 0.0
  %224 = vmatprep.subr.mxu0 0.0
  %225 = vmatpush1.msra.mxu0 0.0
  %226 = vmatprep.subr.mxu0 0.0
  %227 = vmatpush1.msra.mxu0 0.0
  %228 = vmatprep.subr.mxu0 0.0
  %229 = vmatpush1.msra.mxu0 0.0
  %230 = vmatprep.subr.mxu0 0.0
  %231 = vmatpush1.msra.mxu0 0.0
  %232 = vmatprep.subr.mxu0 0.0
  %233 = vmatpush1.msra.mxu0 0.0
  %234 = vmatprep.subr.mxu0 0.0
  %235 = vmatpush1.msra.mxu0 0.0
  %236 = vmatprep.subr.mxu0 0.0
  %237 = vmatpush1.msra.mxu0 0.0
  %238 = vmatprep.subr.mxu0 0.0
  %239 = vmatpush1.msra.mxu0 0.0
  %240 = vmatprep.subr.mxu0 0.0
  %241 = vmatpush1.msra.mxu0 0.0
  %242 = vmatprep.subr.mxu0 0.0
  %243 = vmatpush1.msra.mxu0 0.0
  %244 = vmatprep.subr.mxu0 0.0
  %245 = vmatpush1.msra.mxu0 0.0
  %246 = vmatprep.subr.mxu0 0.0
  %247 = vmatpush1.msra.mxu0 0.0
  %248 = vmatprep.subr.mxu0 0.0
  %249 = vmatpush1.msra.mxu0 0.0
  %250 = vmatprep.subr.mxu0 0.0
  %251 = vmatpush1.msra.mxu0 0.0
  %252 = vmatprep.subr.mxu0 0.0
  %253 = vmatpush1.msra.mxu0 0.0
  %254 = vmatprep.subr.mxu0 0.0
  %255 = vmatpush1.msra.mxu0 0.0
  %256 = vmatprep.subr.mxu0 0.0
  %257 = vmatpush1.msra.mxu0 0.0
  %258 = vmatprep.subr.mxu0 0.0
  %259 = vmatpush1.msra.mxu0 0.0
  %260 = vmatprep.subr.mxu0 0.0
  %261 = vmatpush1.msra.mxu0 0.0
  %262 = vmatprep.subr.mxu0 0.0
  %263 = vmatpush1.msra.mxu0 0.0
  %264 = vmatprep.subr.mxu0 0.0
  %265 = vmatpush1.msra.mxu0 0.0
  %266 = vmatprep.subr.mxu0 0.0
  %267 = vmatpush1.msra.mxu0 0.0
  %268 = vmatprep.subr.mxu0 0.0
  %269 = vmatpush1.msra.mxu0 0.0
  %270 = vmatprep.subr.mxu0 0.0
  %271 = vmatpush1.msra.mxu0 0.0
  %272 = vmatprep.subr.mxu0 0.0
  %273 = vmatpush1.msra.mxu0 0.0
  %274 = vmatprep.subr.mxu0 0.0
  %275 = vmatpush1.msra.mxu0 0.0
  %276 = vmatprep.subr.mxu0 0.0
  %277 = vmatpush1.msra.mxu0 0.0
  %278 = vmatprep.mubr.f32.mxu0 0.0
  %v279 = vand.u32 %v34, 4294901760
  %v280 = vsub.f32 %v34, %v279
  %281 = vmatmul.mubr.f32.gmra.mrb[0].mxu0 %v280
  %v282 = vpop.f32.mrb[0].mxu0
  %v283 = vadd.f32 %v203, %v282
  %v284 = vpop.f32.mrb[0].mxu0
  %285 = vdwg.mxu0
  %286 = vmatprep.subr.mxu0 0.0
  %v287 = vand.u32 %v21, 4294901760
  %288 = vmatpush1.msra.mxu0 %v287
  %289 = vmatprep.subr.mxu0 0.0
  %v290 = vand.u32 %v22, 4294901760
  %291 = vmatpush1.msra.mxu0 %v290
  %292 = vmatprep.subr.mxu0 0.0
  %v293 = vand.u32 %v23, 4294901760
  %294 = vmatpush1.msra.mxu0 %v293
  %295 = vmatprep.subr.mxu0 0.0
  %v296 = vand.u32 %v24, 4294901760
  %297 = vmatpush1.msra.mxu0 %v296
  %298 = vmatprep.subr.mxu0 0.0
  %299 = vmatpush1.msra.mxu0 0.0
  %300 = vmatprep.subr.mxu0 0.0
  %301 = vmatpush1.msra.mxu0 0.0
  %302 = vmatprep.subr.mxu0 0.0
  %303 = vmatpush1.msra.mxu0 0.0
  %304 = vmatprep.subr.mxu0 0.0
  %305 = vmatpush1.msra.mxu0 0.0
  %306 = vmatprep.subr.mxu0 0.0
  %307 = vmatpush1.msra.mxu0 0.0
  %308 = vmatprep.subr.mxu0 0.0
  %309 = vmatpush1.msra.mxu0 0.0
  %310 = vmatprep.subr.mxu0 0.0
  %311 = vmatpush1.msra.mxu0 0.0
  %312 = vmatprep.subr.mxu0 0.0
  %313 = vmatpush1.msra.mxu0 0.0
  %314 = vmatprep.subr.mxu0 0.0
  %315 = vmatpush1.msra.mxu0 0.0
  %316 = vmatprep.subr.mxu0 0.0
  %317 = vmatpush1.msra.mxu0 0.0
  %318 = vmatprep.subr.mxu0 0.0
  %319 = vmatpush1.msra.mxu0 0.0
  %320 = vmatprep.subr.mxu0 0.0
  %321 = vmatpush1.msra.mxu0 0.0
  %322 = vmatprep.subr.mxu0 0.0
  %323 = vmatpush1.msra.mxu0 0.0
  %324 = vmatprep.subr.mxu0 0.0
  %325 = vmatpush1.msra.mxu0 0.0
  %326 = vmatprep.subr.mxu0 0.0
  %327 = vmatpush1.msra.mxu0 0.0
  %328 = vmatprep.subr.mxu0 0.0
  %329 = vmatpush1.msra.mxu0 0.0
  %330 = vmatprep.subr.mxu0 0.0
  %331 = vmatpush1.msra.mxu0 0.0
  %332 = vmatprep.subr.mxu0 0.0
  %333 = vmatpush1.msra.mxu0 0.0
  %334 = vmatprep.subr.mxu0 0.0
  %335 = vmatpush1.msra.mxu0 0.0
  %336 = vmatprep.subr.mxu0 0.0
  %337 = vmatpush1.msra.mxu0 0.0
  %338 = vmatprep.subr.mxu0 0.0
  %339 = vmatpush1.msra.mxu0 0.0
  %340 = vmatprep.subr.mxu0 0.0
  %341 = vmatpush1.msra.mxu0 0.0
  %342 = vmatprep.subr.mxu0 0.0
  %343 = vmatpush1.msra.mxu0 0.0
  %344 = vmatprep.subr.mxu0 0.0
  %345 = vmatpush1.msra.mxu0 0.0
  %346 = vmatprep.subr.mxu0 0.0
  %347 = vmatpush1.msra.mxu0 0.0
  %348 = vmatprep.subr.mxu0 0.0
  %349 = vmatpush1.msra.mxu0 0.0
  %350 = vmatprep.subr.mxu0 0.0
  %351 = vmatpush1.msra.mxu0 0.0
  %352 = vmatprep.subr.mxu0 0.0
  %353 = vmatpush1.msra.mxu0 0.0
  %354 = vmatprep.mubr.f32.mxu0 0.0
  %v355 = vand.u32 %v34, 4294901760
  %v356 = vsub.f32 %v34, %v355
  %v357 = vand.u32 %v356, 4294901760
  %358 = vmatmul.mubr.f32.gmra.mrb[0].mxu0 %v357
  %v359 = vpop.f32.mrb[0].mxu0
  %v360 = vadd.f32 %v283, %v359
  %v361 = vpop.f32.mrb[0].mxu0
  %362 = vdwg.mxu0
  %363 = vmatprep.subr.mxu0 0.0
  %v364 = vand.u32 %v21, 4294901760
  %v365 = vsub.f32 %v21, %v364
  %v366 = vand.u32 %v365, 4294901760
  %367 = vmatpush1.msra.mxu0 %v366
  %368 = vmatprep.subr.mxu0 0.0
  %v369 = vand.u32 %v22, 4294901760
  %v370 = vsub.f32 %v22, %v369
  %v371 = vand.u32 %v370, 4294901760
  %372 = vmatpush1.msra.mxu0 %v371
  %373 = vmatprep.subr.mxu0 0.0
  %v374 = vand.u32 %v23, 4294901760
  %v375 = vsub.f32 %v23, %v374
  %v376 = vand.u32 %v375, 4294901760
  %377 = vmatpush1.msra.mxu0 %v376
  %378 = vmatprep.subr.mxu0 0.0
  %v379 = vand.u32 %v24, 4294901760
  %v380 = vsub.f32 %v24, %v379
  %v381 = vand.u32 %v380, 4294901760
  %382 = vmatpush1.msra.mxu0 %v381
  %383 = vmatprep.subr.mxu0 0.0
  %384 = vmatpush1.msra.mxu0 0.0
  %385 = vmatprep.subr.mxu0 0.0
  %386 = vmatpush1.msra.mxu0 0.0
  %387 = vmatprep.subr.mxu0 0.0
  %388 = vmatpush1.msra.mxu0 0.0
  %389 = vmatprep.subr.mxu0 0.0
  %390 = vmatpush1.msra.mxu0 0.0
  %391 = vmatprep.subr.mxu0 0.0
  %392 = vmatpush1.msra.mxu0 0.0
  %393 = vmatprep.subr.mxu0 0.0
  %394 = vmatpush1.msra.mxu0 0.0
  %395 = vmatprep.subr.mxu0 0.0
  %396 = vmatpush1.msra.mxu0 0.0
  %397 = vmatprep.subr.mxu0 0.0
  %398 = vmatpush1.msra.mxu0 0.0
  %399 = vmatprep.subr.mxu0 0.0
  %400 = vmatpush1.msra.mxu0 0.0
  %401 = vmatprep.subr.mxu0 0.0
  %402 = vmatpush1.msra.mxu0 0.0
  %403 = vmatprep.subr.mxu0 0.0
  %404 = vmatpush1.msra.mxu0 0.0
  %405 = vmatprep.subr.mxu0 0.0
  %406 = vmatpush1.msra.mxu0 0.0
  %407 = vmatprep.subr.mxu0 0.0
  %408 = vmatpush1.msra.mxu0 0.0
  %409 = vmatprep.subr.mxu0 0.0
  %410 = vmatpush1.msra.mxu0 0.0
  %411 = vmatprep.subr.mxu0 0.0
  %412 = vmatpush1.msra.mxu0 0.0
  %413 = vmatprep.subr.mxu0 0.0
  %414 = vmatpush1.msra.mxu0 0.0
  %415 = vmatprep.subr.mxu0 0.0
  %416 = vmatpush1.msra.mxu0 0.0
  %417 = vmatprep.subr.mxu0 0.0
  %418 = vmatpush1.msra.mxu0 0.0
  %419 = vmatprep.subr.mxu0 0.0
  %420 = vmatpush1.msra.mxu0 0.0
  %421 = vmatprep.subr.mxu0 0.0
  %422 = vmatpush1.msra.mxu0 0.0
  %423 = vmatprep.subr.mxu0 0.0
  %424 = vmatpush1.msra.mxu0 0.0
  %425 = vmatprep.subr.mxu0 0.0
  %426 = vmatpush1.msra.mxu0 0.0
  %427 = vmatprep.subr.mxu0 0.0
  %428 = vmatpush1.msra.mxu0 0.0
  %429 = vmatprep.subr.mxu0 0.0
  %430 = vmatpush1.msra.mxu0 0.0
  %431 = vmatprep.subr.mxu0 0.0
  %432 = vmatpush1.msra.mxu0 0.0
  %433 = vmatprep.subr.mxu0 0.0
  %434 = vmatpush1.msra.mxu0 0.0
  %435 = vmatprep.subr.mxu0 0.0
  %436 = vmatpush1.msra.mxu0 0.0
  %437 = vmatprep.subr.mxu0 0.0
  %438 = vmatpush1.msra.mxu0 0.0
  %439 = vmatprep.mubr.f32.mxu0 0.0
  %v440 = vand.u32 %v34, 4294901760
  %441 = vmatmul.mubr.f32.gmra.mrb[0].mxu0 %v440
  %v442 = vpop.f32.mrb[0].mxu0
  %v443 = vadd.f32 %v360, %v442
  %v444 = vpop.f32.mrb[0].mxu0
  %445 = vdwg.mxu0
  %446 = vmatprep.subr.mxu0 0.0
  %v447 = vand.u32 %v21, 4294901760
  %448 = vmatpush1.msra.mxu0 %v447
  %449 = vmatprep.subr.mxu0 0.0
  %v450 = vand.u32 %v22, 4294901760
  %451 = vmatpush1.msra.mxu0 %v450
  %452 = vmatprep.subr.mxu0 0.0
  %v453 = vand.u32 %v23, 4294901760
  %454 = vmatpush1.msra.mxu0 %v453
  %455 = vmatprep.subr.mxu0 0.0
  %v456 = vand.u32 %v24, 4294901760
  %457 = vmatpush1.msra.mxu0 %v456
  %458 = vmatprep.subr.mxu0 0.0
  %459 = vmatpush1.msra.mxu0 0.0
  %460 = vmatprep.subr.mxu0 0.0
  %461 = vmatpush1.msra.mxu0 0.0
  %462 = vmatprep.subr.mxu0 0.0
  %463 = vmatpush1.msra.mxu0 0.0
  %464 = vmatprep.subr.mxu0 0.0
  %465 = vmatpush1.msra.mxu0 0.0
  %466 = vmatprep.subr.mxu0 0.0
  %467 = vmatpush1.msra.mxu0 0.0
  %468 = vmatprep.subr.mxu0 0.0
  %469 = vmatpush1.msra.mxu0 0.0
  %470 = vmatprep.subr.mxu0 0.0
  %471 = vmatpush1.msra.mxu0 0.0
  %472 = vmatprep.subr.mxu0 0.0
  %473 = vmatpush1.msra.mxu0 0.0
  %474 = vmatprep.subr.mxu0 0.0
  %475 = vmatpush1.msra.mxu0 0.0
  %476 = vmatprep.subr.mxu0 0.0
  %477 = vmatpush1.msra.mxu0 0.0
  %478 = vmatprep.subr.mxu0 0.0
  %479 = vmatpush1.msra.mxu0 0.0
  %480 = vmatprep.subr.mxu0 0.0
  %481 = vmatpush1.msra.mxu0 0.0
  %482 = vmatprep.subr.mxu0 0.0
  %483 = vmatpush1.msra.mxu0 0.0
  %484 = vmatprep.subr.mxu0 0.0
  %485 = vmatpush1.msra.mxu0 0.0
  %486 = vmatprep.subr.mxu0 0.0
  %487 = vmatpush1.msra.mxu0 0.0
  %488 = vmatprep.subr.mxu0 0.0
  %489 = vmatpush1.msra.mxu0 0.0
  %490 = vmatprep.subr.mxu0 0.0
  %491 = vmatpush1.msra.mxu0 0.0
  %492 = vmatprep.subr.mxu0 0.0
  %493 = vmatpush1.msra.mxu0 0.0
  %494 = vmatprep.subr.mxu0 0.0
  %495 = vmatpush1.msra.mxu0 0.0
  %496 = vmatprep.subr.mxu0 0.0
  %497 = vmatpush1.msra.mxu0 0.0
  %498 = vmatprep.subr.mxu0 0.0
  %499 = vmatpush1.msra.mxu0 0.0
  %500 = vmatprep.subr.mxu0 0.0
  %501 = vmatpush1.msra.mxu0 0.0
  %502 = vmatprep.subr.mxu0 0.0
  %503 = vmatpush1.msra.mxu0 0.0
  %504 = vmatprep.subr.mxu0 0.0
  %505 = vmatpush1.msra.mxu0 0.0
  %506 = vmatprep.subr.mxu0 0.0
  %507 = vmatpush1.msra.mxu0 0.0
  %508 = vmatprep.subr.mxu0 0.0
  %509 = vmatpush1.msra.mxu0 0.0
  %510 = vmatprep.subr.mxu0 0.0
  %511 = vmatpush1.msra.mxu0 0.0
  %512 = vmatprep.subr.mxu0 0.0
  %513 = vmatpush1.msra.mxu0 0.0
  %514 = vmatprep.mubr.f32.mxu0 0.0
  %v515 = vand.u32 %v34, 4294901760
  %516 = vmatmul.mubr.f32.gmra.mrb[0].mxu0 %v515
  %v517 = vpop.f32.mrb[0].mxu0
  %v518 = vadd.f32 %v443, %v517
  %v519 = vpop.f32.mrb[0].mxu0
  %520 = vdwg.mxu0
  %v521 = vld [vmem:[%s0] sm:$0xff]
  %vm522 = vcmp.ne.s32.totalorder %v521, 0
  %v523 = vlaneseq
  %v524 = vand.u32 %v523, 127
  %525 = vset.pattern.permute.xlu0 0
  %526 = vperm.xlu0 %525, %v521
  %v527 = vpop.permute.xlu0 %526
  %vm528 = vcmp.ge.s32.totalorder %v524, %v527
  %v529 = vadd.s32 %v521, 16
  %530 = vset.pattern.permute.xlu0 0
  %531 = vperm.xlu0 %530, %v529
  %v532 = vpop.permute.xlu0 %531
  %vm533 = vcmp.lt.s32.totalorder %v524, %v532
  %vm534 = vmand %vm528, %vm533
  %v535 = vsel %vm534, %v518, 0.0
  %v536 = vld [vmem:[%s4] sm:$0xff]
  %v537 = vld [vmem:[%s4 + $0x8] sm:$0xff]
  %v538 = vld [vmem:[%s4 + $0x10] sm:$0xff]
  %v539 = vld [vmem:[%s4 + $0x18] sm:$0xff]
  %v540 = vld [vmem:[%s4 + $0x20] sm:$0xff]
  %v541 = vld [vmem:[%s4 + $0x28] sm:$0xff]
  %v542 = vld [vmem:[%s4 + $0x30] sm:$0xff]
  %v543 = vld [vmem:[%s4 + $0x38] sm:$0xff]
  %v544 = vld [vmem:[%s4 + $0x40] sm:$0xff]
  %v545 = vld [vmem:[%s4 + $0x48] sm:$0xff]
  %v546 = vld [vmem:[%s4 + $0x50] sm:$0xff]
  %v547 = vld [vmem:[%s4 + $0x58] sm:$0xff]
  %v548 = vld [vmem:[%s4 + $0x60] sm:$0xff]
  %v549 = vld [vmem:[%s4 + $0x68] sm:$0xff]
  %v550 = vld [vmem:[%s4 + $0x70] sm:$0xff]
  %v551 = vld [vmem:[%s4 + $0x78] sm:$0xff]
  %552 = vmatprep.subr.mxu0 0.0
  %v553 = vand.u32 %v536, 4294901760
  %554 = vmatpush1.msra.mxu0 %v553
  %555 = vmatprep.subr.mxu0 0.0
  %v556 = vand.u32 %v537, 4294901760
  %557 = vmatpush1.msra.mxu0 %v556
  %558 = vmatprep.subr.mxu0 0.0
  %v559 = vand.u32 %v538, 4294901760
  %560 = vmatpush1.msra.mxu0 %v559
  %561 = vmatprep.subr.mxu0 0.0
  %v562 = vand.u32 %v539, 4294901760
  %563 = vmatpush1.msra.mxu0 %v562
  %564 = vmatprep.subr.mxu0 0.0
  %v565 = vand.u32 %v540, 4294901760
  %566 = vmatpush1.msra.mxu0 %v565
  %567 = vmatprep.subr.mxu0 0.0
  %v568 = vand.u32 %v541, 4294901760
  %569 = vmatpush1.msra.mxu0 %v568
  %570 = vmatprep.subr.mxu0 0.0
  %v571 = vand.u32 %v542, 4294901760
  %572 = vmatpush1.msra.mxu0 %v571
  %573 = vmatprep.subr.mxu0 0.0
  %v574 = vand.u32 %v543, 4294901760
  %575 = vmatpush1.msra.mxu0 %v574
  %576 = vmatprep.subr.mxu0 0.0
  %v577 = vand.u32 %v544, 4294901760
  %578 = vmatpush1.msra.mxu0 %v577
  %579 = vmatprep.subr.mxu0 0.0
  %v580 = vand.u32 %v545, 4294901760
  %581 = vmatpush1.msra.mxu0 %v580
  %582 = vmatprep.subr.mxu0 0.0
  %v583 = vand.u32 %v546, 4294901760
  %584 = vmatpush1.msra.mxu0 %v583
  %585 = vmatprep.subr.mxu0 0.0
  %v586 = vand.u32 %v547, 4294901760
  %587 = vmatpush1.msra.mxu0 %v586
  %588 = vmatprep.subr.mxu0 0.0
  %v589 = vand.u32 %v548, 4294901760
  %590 = vmatpush1.msra.mxu0 %v589
  %591 = vmatprep.subr.mxu0 0.0
  %v592 = vand.u32 %v549, 4294901760
  %593 = vmatpush1.msra.mxu0 %v592
  %594 = vmatprep.subr.mxu0 0.0
  %v595 = vand.u32 %v550, 4294901760
  %596 = vmatpush1.msra.mxu0 %v595
  %597 = vmatprep.subr.mxu0 0.0
  %v598 = vand.u32 %v551, 4294901760
  %599 = vmatpush1.msra.mxu0 %v598
  %600 = vmatprep.subr.mxu0 0.0
  %601 = vmatpush1.msra.mxu0 0.0
  %602 = vmatprep.subr.mxu0 0.0
  %603 = vmatpush1.msra.mxu0 0.0
  %604 = vmatprep.subr.mxu0 0.0
  %605 = vmatpush1.msra.mxu0 0.0
  %606 = vmatprep.subr.mxu0 0.0
  %607 = vmatpush1.msra.mxu0 0.0
  %608 = vmatprep.subr.mxu0 0.0
  %609 = vmatpush1.msra.mxu0 0.0
  %610 = vmatprep.subr.mxu0 0.0
  %611 = vmatpush1.msra.mxu0 0.0
  %612 = vmatprep.subr.mxu0 0.0
  %613 = vmatpush1.msra.mxu0 0.0
  %614 = vmatprep.subr.mxu0 0.0
  %615 = vmatpush1.msra.mxu0 0.0
  %616 = vmatprep.subr.mxu0 0.0
  %617 = vmatpush1.msra.mxu0 0.0
  %618 = vmatprep.subr.mxu0 0.0
  %619 = vmatpush1.msra.mxu0 0.0
  %620 = vmatprep.subr.mxu0 0.0
  %621 = vmatpush1.msra.mxu0 0.0
  %622 = vmatprep.subr.mxu0 0.0
  %623 = vmatpush1.msra.mxu0 0.0
  %624 = vmatprep.subr.mxu0 0.0
  %625 = vmatpush1.msra.mxu0 0.0
  %626 = vmatprep.subr.mxu0 0.0
  %627 = vmatpush1.msra.mxu0 0.0
  %628 = vmatprep.subr.mxu0 0.0
  %629 = vmatpush1.msra.mxu0 0.0
  %630 = vmatprep.subr.mxu0 0.0
  %631 = vmatpush1.msra.mxu0 0.0
  %632 = vmatprep.mubr.f32.mxu0 0.0
  %v633 = vand.u32 %v535, 4294901760
  %v634 = vsub.f32 %v535, %v633
  %v635 = vand.u32 %v634, 4294901760
  %v636 = vsub.f32 %v634, %v635
  %v637 = vand.u32 %v636, 4294901760
  %638 = vmatmul.mubr.f32.gmra.mrb[0].mxu0 %v637
  %v639 = vpop.f32.mrb[0].mxu0
  %v640 = vadd.f32 0.0, %v639
  %v641 = vpop.f32.mrb[0].mxu0
  %642 = vdwg.mxu0
  %643 = vmatprep.subr.mxu0 0.0
  %v644 = vand.u32 %v536, 4294901760
  %v645 = vsub.f32 %v536, %v644
  %v646 = vand.u32 %v645, 4294901760
  %v647 = vsub.f32 %v645, %v646
  %v648 = vand.u32 %v647, 4294901760
  %649 = vmatpush1.msra.mxu0 %v648
  %650 = vmatprep.subr.mxu0 0.0
  %v651 = vand.u32 %v537, 4294901760
  %v652 = vsub.f32 %v537, %v651
  %v653 = vand.u32 %v652, 4294901760
  %v654 = vsub.f32 %v652, %v653
  %v655 = vand.u32 %v654, 4294901760
  %656 = vmatpush1.msra.mxu0 %v655
  %657 = vmatprep.subr.mxu0 0.0
  %v658 = vand.u32 %v538, 4294901760
  %v659 = vsub.f32 %v538, %v658
  %v660 = vand.u32 %v659, 4294901760
  %v661 = vsub.f32 %v659, %v660
  %v662 = vand.u32 %v661, 4294901760
  %663 = vmatpush1.msra.mxu0 %v662
  %664 = vmatprep.subr.mxu0 0.0
  %v665 = vand.u32 %v539, 4294901760
  %v666 = vsub.f32 %v539, %v665
  %v667 = vand.u32 %v666, 4294901760
  %v668 = vsub.f32 %v666, %v667
  %v669 = vand.u32 %v668, 4294901760
  %670 = vmatpush1.msra.mxu0 %v669
  %671 = vmatprep.subr.mxu0 0.0
  %v672 = vand.u32 %v540, 4294901760
  %v673 = vsub.f32 %v540, %v672
  %v674 = vand.u32 %v673, 4294901760
  %v675 = vsub.f32 %v673, %v674
  %v676 = vand.u32 %v675, 4294901760
  %677 = vmatpush1.msra.mxu0 %v676
  %678 = vmatprep.subr.mxu0 0.0
  %v679 = vand.u32 %v541, 4294901760
  %v680 = vsub.f32 %v541, %v679
  %v681 = vand.u32 %v680, 4294901760
  %v682 = vsub.f32 %v680, %v681
  %v683 = vand.u32 %v682, 4294901760
  %684 = vmatpush1.msra.mxu0 %v683
  %685 = vmatprep.subr.mxu0 0.0
  %v686 = vand.u32 %v542, 4294901760
  %v687 = vsub.f32 %v542, %v686
  %v688 = vand.u32 %v687, 4294901760
  %v689 = vsub.f32 %v687, %v688
  %v690 = vand.u32 %v689, 4294901760
  %691 = vmatpush1.msra.mxu0 %v690
  %692 = vmatprep.subr.mxu0 0.0
  %v693 = vand.u32 %v543, 4294901760
  %v694 = vsub.f32 %v543, %v693
  %v695 = vand.u32 %v694, 4294901760
  %v696 = vsub.f32 %v694, %v695
  %v697 = vand.u32 %v696, 4294901760
  %698 = vmatpush1.msra.mxu0 %v697
  %699 = vmatprep.subr.mxu0 0.0
  %v700 = vand.u32 %v544, 4294901760
  %v701 = vsub.f32 %v544, %v700
  %v702 = vand.u32 %v701, 4294901760
  %v703 = vsub.f32 %v701, %v702
  %v704 = vand.u32 %v703, 4294901760
  %705 = vmatpush1.msra.mxu0 %v704
  %706 = vmatprep.subr.mxu0 0.0
  %v707 = vand.u32 %v545, 4294901760
  %v708 = vsub.f32 %v545, %v707
  %v709 = vand.u32 %v708, 4294901760
  %v710 = vsub.f32 %v708, %v709
  %v711 = vand.u32 %v710, 4294901760
  %712 = vmatpush1.msra.mxu0 %v711
  %713 = vmatprep.subr.mxu0 0.0
  %v714 = vand.u32 %v546, 4294901760
  %v715 = vsub.f32 %v546, %v714
  %v716 = vand.u32 %v715, 4294901760
  %v717 = vsub.f32 %v715, %v716
  %v718 = vand.u32 %v717, 4294901760
  %719 = vmatpush1.msra.mxu0 %v718
  %720 = vmatprep.subr.mxu0 0.0
  %v721 = vand.u32 %v547, 4294901760
  %v722 = vsub.f32 %v547, %v721
  %v723 = vand.u32 %v722, 4294901760
  %v724 = vsub.f32 %v722, %v723
  %v725 = vand.u32 %v724, 4294901760
  %726 = vmatpush1.msra.mxu0 %v725
  %727 = vmatprep.subr.mxu0 0.0
  %v728 = vand.u32 %v548, 4294901760
  %v729 = vsub.f32 %v548, %v728
  %v730 = vand.u32 %v729, 4294901760
  %v731 = vsub.f32 %v729, %v730
  %v732 = vand.u32 %v731, 4294901760
  %733 = vmatpush1.msra.mxu0 %v732
  %734 = vmatprep.subr.mxu0 0.0
  %v735 = vand.u32 %v549, 4294901760
  %v736 = vsub.f32 %v549, %v735
  %v737 = vand.u32 %v736, 4294901760
  %v738 = vsub.f32 %v736, %v737
  %v739 = vand.u32 %v738, 4294901760
  %740 = vmatpush1.msra.mxu0 %v739
  %741 = vmatprep.subr.mxu0 0.0
  %v742 = vand.u32 %v550, 4294901760
  %v743 = vsub.f32 %v550, %v742
  %v744 = vand.u32 %v743, 4294901760
  %v745 = vsub.f32 %v743, %v744
  %v746 = vand.u32 %v745, 4294901760
  %747 = vmatpush1.msra.mxu0 %v746
  %748 = vmatprep.subr.mxu0 0.0
  %v749 = vand.u32 %v551, 4294901760
  %v750 = vsub.f32 %v551, %v749
  %v751 = vand.u32 %v750, 4294901760
  %v752 = vsub.f32 %v750, %v751
  %v753 = vand.u32 %v752, 4294901760
  %754 = vmatpush1.msra.mxu0 %v753
  %755 = vmatprep.subr.mxu0 0.0
  %756 = vmatpush1.msra.mxu0 0.0
  %757 = vmatprep.subr.mxu0 0.0
  %758 = vmatpush1.msra.mxu0 0.0
  %759 = vmatprep.subr.mxu0 0.0
  %760 = vmatpush1.msra.mxu0 0.0
  %761 = vmatprep.subr.mxu0 0.0
  %762 = vmatpush1.msra.mxu0 0.0
  %763 = vmatprep.subr.mxu0 0.0
  %764 = vmatpush1.msra.mxu0 0.0
  %765 = vmatprep.subr.mxu0 0.0
  %766 = vmatpush1.msra.mxu0 0.0
  %767 = vmatprep.subr.mxu0 0.0
  %768 = vmatpush1.msra.mxu0 0.0
  %769 = vmatprep.subr.mxu0 0.0
  %770 = vmatpush1.msra.mxu0 0.0
  %771 = vmatprep.subr.mxu0 0.0
  %772 = vmatpush1.msra.mxu0 0.0
  %773 = vmatprep.subr.mxu0 0.0
  %774 = vmatpush1.msra.mxu0 0.0
  %775 = vmatprep.subr.mxu0 0.0
  %776 = vmatpush1.msra.mxu0 0.0
  %777 = vmatprep.subr.mxu0 0.0
  %778 = vmatpush1.msra.mxu0 0.0
  %779 = vmatprep.subr.mxu0 0.0
  %780 = vmatpush1.msra.mxu0 0.0
  %781 = vmatprep.subr.mxu0 0.0
  %782 = vmatpush1.msra.mxu0 0.0
  %783 = vmatprep.subr.mxu0 0.0
  %784 = vmatpush1.msra.mxu0 0.0
  %785 = vmatprep.subr.mxu0 0.0
  %786 = vmatpush1.msra.mxu0 0.0
  %787 = vmatprep.mubr.f32.mxu0 0.0
  %v788 = vand.u32 %v535, 4294901760
  %789 = vmatmul.mubr.f32.gmra.mrb[0].mxu0 %v788
  %v790 = vpop.f32.mrb[0].mxu0
  %v791 = vadd.f32 %v640, %v790
  %v792 = vpop.f32.mrb[0].mxu0
  %793 = vdwg.mxu0
  %794 = vmatprep.subr.mxu0 0.0
  %v795 = vand.u32 %v536, 4294901760
  %v796 = vsub.f32 %v536, %v795
  %797 = vmatpush1.msra.mxu0 %v796
  %798 = vmatprep.subr.mxu0 0.0
  %v799 = vand.u32 %v537, 4294901760
  %v800 = vsub.f32 %v537, %v799
  %801 = vmatpush1.msra.mxu0 %v800
  %802 = vmatprep.subr.mxu0 0.0
  %v803 = vand.u32 %v538, 4294901760
  %v804 = vsub.f32 %v538, %v803
  %805 = vmatpush1.msra.mxu0 %v804
  %806 = vmatprep.subr.mxu0 0.0
  %v807 = vand.u32 %v539, 4294901760
  %v808 = vsub.f32 %v539, %v807
  %809 = vmatpush1.msra.mxu0 %v808
  %810 = vmatprep.subr.mxu0 0.0
  %v811 = vand.u32 %v540, 4294901760
  %v812 = vsub.f32 %v540, %v811
  %813 = vmatpush1.msra.mxu0 %v812
  %814 = vmatprep.subr.mxu0 0.0
  %v815 = vand.u32 %v541, 4294901760
  %v816 = vsub.f32 %v541, %v815
  %817 = vmatpush1.msra.mxu0 %v816
  %818 = vmatprep.subr.mxu0 0.0
  %v819 = vand.u32 %v542, 4294901760
  %v820 = vsub.f32 %v542, %v819
  %821 = vmatpush1.msra.mxu0 %v820
  %822 = vmatprep.subr.mxu0 0.0
  %v823 = vand.u32 %v543, 4294901760
  %v824 = vsub.f32 %v543, %v823
  %825 = vmatpush1.msra.mxu0 %v824
  %826 = vmatprep.subr.mxu0 0.0
  %v827 = vand.u32 %v544, 4294901760
  %v828 = vsub.f32 %v544, %v827
  %829 = vmatpush1.msra.mxu0 %v828
  %830 = vmatprep.subr.mxu0 0.0
  %v831 = vand.u32 %v545, 4294901760
  %v832 = vsub.f32 %v545, %v831
  %833 = vmatpush1.msra.mxu0 %v832
  %834 = vmatprep.subr.mxu0 0.0
  %v835 = vand.u32 %v546, 4294901760
  %v836 = vsub.f32 %v546, %v835
  %837 = vmatpush1.msra.mxu0 %v836
  %838 = vmatprep.subr.mxu0 0.0
  %v839 = vand.u32 %v547, 4294901760
  %v840 = vsub.f32 %v547, %v839
  %841 = vmatpush1.msra.mxu0 %v840
  %842 = vmatprep.subr.mxu0 0.0
  %v843 = vand.u32 %v548, 4294901760
  %v844 = vsub.f32 %v548, %v843
  %845 = vmatpush1.msra.mxu0 %v844
  %846 = vmatprep.subr.mxu0 0.0
  %v847 = vand.u32 %v549, 4294901760
  %v848 = vsub.f32 %v549, %v847
  %849 = vmatpush1.msra.mxu0 %v848
  %850 = vmatprep.subr.mxu0 0.0
  %v851 = vand.u32 %v550, 4294901760
  %v852 = vsub.f32 %v550, %v851
  %853 = vmatpush1.msra.mxu0 %v852
  %854 = vmatprep.subr.mxu0 0.0
  %v855 = vand.u32 %v551, 4294901760
  %v856 = vsub.f32 %v551, %v855
  %857 = vmatpush1.msra.mxu0 %v856
  %858 = vmatprep.subr.mxu0 0.0
  %859 = vmatpush1.msra.mxu0 0.0
  %860 = vmatprep.subr.mxu0 0.0
  %861 = vmatpush1.msra.mxu0 0.0
  %862 = vmatprep.subr.mxu0 0.0
  %863 = vmatpush1.msra.mxu0 0.0
  %864 = vmatprep.subr.mxu0 0.0
  %865 = vmatpush1.msra.mxu0 0.0
  %866 = vmatprep.subr.mxu0 0.0
  %867 = vmatpush1.msra.mxu0 0.0
  %868 = vmatprep.subr.mxu0 0.0
  %869 = vmatpush1.msra.mxu0 0.0
  %870 = vmatprep.subr.mxu0 0.0
  %871 = vmatpush1.msra.mxu0 0.0
  %872 = vmatprep.subr.mxu0 0.0
  %873 = vmatpush1.msra.mxu0 0.0
  %874 = vmatprep.subr.mxu0 0.0
  %875 = vmatpush1.msra.mxu0 0.0
  %876 = vmatprep.subr.mxu0 0.0
  %877 = vmatpush1.msra.mxu0 0.0
  %878 = vmatprep.subr.mxu0 0.0
  %879 = vmatpush1.msra.mxu0 0.0
  %880 = vmatprep.subr.mxu0 0.0
  %881 = vmatpush1.msra.mxu0 0.0
  %882 = vmatprep.subr.mxu0 0.0
  %883 = vmatpush1.msra.mxu0 0.0
  %884 = vmatprep.subr.mxu0 0.0
  %885 = vmatpush1.msra.mxu0 0.0
  %886 = vmatprep.subr.mxu0 0.0
  %887 = vmatpush1.msra.mxu0 0.0
  %888 = vmatprep.subr.mxu0 0.0
  %889 = vmatpush1.msra.mxu0 0.0
  %890 = vmatprep.mubr.f32.mxu0 0.0
  %v891 = vand.u32 %v535, 4294901760
  %v892 = vsub.f32 %v535, %v891
  %893 = vmatmul.mubr.f32.gmra.mrb[0].mxu0 %v892
  %v894 = vpop.f32.mrb[0].mxu0
  %v895 = vadd.f32 %v791, %v894
  %v896 = vpop.f32.mrb[0].mxu0
  %897 = vdwg.mxu0
  %898 = vmatprep.subr.mxu0 0.0
  %v899 = vand.u32 %v536, 4294901760
  %900 = vmatpush1.msra.mxu0 %v899
  %901 = vmatprep.subr.mxu0 0.0
  %v902 = vand.u32 %v537, 4294901760
  %903 = vmatpush1.msra.mxu0 %v902
  %904 = vmatprep.subr.mxu0 0.0
  %v905 = vand.u32 %v538, 4294901760
  %906 = vmatpush1.msra.mxu0 %v905
  %907 = vmatprep.subr.mxu0 0.0
  %v908 = vand.u32 %v539, 4294901760
  %909 = vmatpush1.msra.mxu0 %v908
  %910 = vmatprep.subr.mxu0 0.0
  %v911 = vand.u32 %v540, 4294901760
  %912 = vmatpush1.msra.mxu0 %v911
  %913 = vmatprep.subr.mxu0 0.0
  %v914 = vand.u32 %v541, 4294901760
  %915 = vmatpush1.msra.mxu0 %v914
  %916 = vmatprep.subr.mxu0 0.0
  %v917 = vand.u32 %v542, 4294901760
  %918 = vmatpush1.msra.mxu0 %v917
  %919 = vmatprep.subr.mxu0 0.0
  %v920 = vand.u32 %v543, 4294901760
  %921 = vmatpush1.msra.mxu0 %v920
  %922 = vmatprep.subr.mxu0 0.0
  %v923 = vand.u32 %v544, 4294901760
  %924 = vmatpush1.msra.mxu0 %v923
  %925 = vmatprep.subr.mxu0 0.0
  %v926 = vand.u32 %v545, 4294901760
  %927 = vmatpush1.msra.mxu0 %v926
  %928 = vmatprep.subr.mxu0 0.0
  %v929 = vand.u32 %v546, 4294901760
  %930 = vmatpush1.msra.mxu0 %v929
  %931 = vmatprep.subr.mxu0 0.0
  %v932 = vand.u32 %v547, 4294901760
  %933 = vmatpush1.msra.mxu0 %v932
  %934 = vmatprep.subr.mxu0 0.0
  %v935 = vand.u32 %v548, 4294901760
  %936 = vmatpush1.msra.mxu0 %v935
  %937 = vmatprep.subr.mxu0 0.0
  %v938 = vand.u32 %v549, 4294901760
  %939 = vmatpush1.msra.mxu0 %v938
  %940 = vmatprep.subr.mxu0 0.0
  %v941 = vand.u32 %v550, 4294901760
  %942 = vmatpush1.msra.mxu0 %v941
  %943 = vmatprep.subr.mxu0 0.0
  %v944 = vand.u32 %v551, 4294901760
  %945 = vmatpush1.msra.mxu0 %v944
  %946 = vmatprep.subr.mxu0 0.0
  %947 = vmatpush1.msra.mxu0 0.0
  %948 = vmatprep.subr.mxu0 0.0
  %949 = vmatpush1.msra.mxu0 0.0
  %950 = vmatprep.subr.mxu0 0.0
  %951 = vmatpush1.msra.mxu0 0.0
  %952 = vmatprep.subr.mxu0 0.0
  %953 = vmatpush1.msra.mxu0 0.0
  %954 = vmatprep.subr.mxu0 0.0
  %955 = vmatpush1.msra.mxu0 0.0
  %956 = vmatprep.subr.mxu0 0.0
  %957 = vmatpush1.msra.mxu0 0.0
  %958 = vmatprep.subr.mxu0 0.0
  %959 = vmatpush1.msra.mxu0 0.0
  %960 = vmatprep.subr.mxu0 0.0
  %961 = vmatpush1.msra.mxu0 0.0
  %962 = vmatprep.subr.mxu0 0.0
  %963 = vmatpush1.msra.mxu0 0.0
  %964 = vmatprep.subr.mxu0 0.0
  %965 = vmatpush1.msra.mxu0 0.0
  %966 = vmatprep.subr.mxu0 0.0
  %967 = vmatpush1.msra.mxu0 0.0
  %968 = vmatprep.subr.mxu0 0.0
  %969 = vmatpush1.msra.mxu0 0.0
  %970 = vmatprep.subr.mxu0 0.0
  %971 = vmatpush1.msra.mxu0 0.0
  %972 = vmatprep.subr.mxu0 0.0
  %973 = vmatpush1.msra.mxu0 0.0
  %974 = vmatprep.subr.mxu0 0.0
  %975 = vmatpush1.msra.mxu0 0.0
  %976 = vmatprep.subr.mxu0 0.0
  %977 = vmatpush1.msra.mxu0 0.0
  %978 = vmatprep.mubr.f32.mxu0 0.0
  %v979 = vand.u32 %v535, 4294901760
  %v980 = vsub.f32 %v535, %v979
  %v981 = vand.u32 %v980, 4294901760
  %982 = vmatmul.mubr.f32.gmra.mrb[0].mxu0 %v981
  %v983 = vpop.f32.mrb[0].mxu0
  %v984 = vadd.f32 %v895, %v983
  %v985 = vpop.f32.mrb[0].mxu0
  %986 = vdwg.mxu0
  %987 = vmatprep.subr.mxu0 0.0
  %v988 = vand.u32 %v536, 4294901760
  %v989 = vsub.f32 %v536, %v988
  %v990 = vand.u32 %v989, 4294901760
  %991 = vmatpush1.msra.mxu0 %v990
  %992 = vmatprep.subr.mxu0 0.0
  %v993 = vand.u32 %v537, 4294901760
  %v994 = vsub.f32 %v537, %v993
  %v995 = vand.u32 %v994, 4294901760
  %996 = vmatpush1.msra.mxu0 %v995
  %997 = vmatprep.subr.mxu0 0.0
  %v998 = vand.u32 %v538, 4294901760
  %v999 = vsub.f32 %v538, %v998
  %v1000 = vand.u32 %v999, 4294901760
  %1001 = vmatpush1.msra.mxu0 %v1000
  %1002 = vmatprep.subr.mxu0 0.0
  %v1003 = vand.u32 %v539, 4294901760
  %v1004 = vsub.f32 %v539, %v1003
  %v1005 = vand.u32 %v1004, 4294901760
  %1006 = vmatpush1.msra.mxu0 %v1005
  %1007 = vmatprep.subr.mxu0 0.0
  %v1008 = vand.u32 %v540, 4294901760
  %v1009 = vsub.f32 %v540, %v1008
  %v1010 = vand.u32 %v1009, 4294901760
  %1011 = vmatpush1.msra.mxu0 %v1010
  %1012 = vmatprep.subr.mxu0 0.0
  %v1013 = vand.u32 %v541, 4294901760
  %v1014 = vsub.f32 %v541, %v1013
  %v1015 = vand.u32 %v1014, 4294901760
  %1016 = vmatpush1.msra.mxu0 %v1015
  %1017 = vmatprep.subr.mxu0 0.0
  %v1018 = vand.u32 %v542, 4294901760
  %v1019 = vsub.f32 %v542, %v1018
  %v1020 = vand.u32 %v1019, 4294901760
  %1021 = vmatpush1.msra.mxu0 %v1020
  %1022 = vmatprep.subr.mxu0 0.0
  %v1023 = vand.u32 %v543, 4294901760
  %v1024 = vsub.f32 %v543, %v1023
  %v1025 = vand.u32 %v1024, 4294901760
  %1026 = vmatpush1.msra.mxu0 %v1025
  %1027 = vmatprep.subr.mxu0 0.0
  %v1028 = vand.u32 %v544, 4294901760
  %v1029 = vsub.f32 %v544, %v1028
  %v1030 = vand.u32 %v1029, 4294901760
  %1031 = vmatpush1.msra.mxu0 %v1030
  %1032 = vmatprep.subr.mxu0 0.0
  %v1033 = vand.u32 %v545, 4294901760
  %v1034 = vsub.f32 %v545, %v1033
  %v1035 = vand.u32 %v1034, 4294901760
  %1036 = vmatpush1.msra.mxu0 %v1035
  %1037 = vmatprep.subr.mxu0 0.0
  %v1038 = vand.u32 %v546, 4294901760
  %v1039 = vsub.f32 %v546, %v1038
  %v1040 = vand.u32 %v1039, 4294901760
  %1041 = vmatpush1.msra.mxu0 %v1040
  %1042 = vmatprep.subr.mxu0 0.0
  %v1043 = vand.u32 %v547, 4294901760
  %v1044 = vsub.f32 %v547, %v1043
  %v1045 = vand.u32 %v1044, 4294901760
  %1046 = vmatpush1.msra.mxu0 %v1045
  %1047 = vmatprep.subr.mxu0 0.0
  %v1048 = vand.u32 %v548, 4294901760
  %v1049 = vsub.f32 %v548, %v1048
  %v1050 = vand.u32 %v1049, 4294901760
  %1051 = vmatpush1.msra.mxu0 %v1050
  %1052 = vmatprep.subr.mxu0 0.0
  %v1053 = vand.u32 %v549, 4294901760
  %v1054 = vsub.f32 %v549, %v1053
  %v1055 = vand.u32 %v1054, 4294901760
  %1056 = vmatpush1.msra.mxu0 %v1055
  %1057 = vmatprep.subr.mxu0 0.0
  %v1058 = vand.u32 %v550, 4294901760
  %v1059 = vsub.f32 %v550, %v1058
  %v1060 = vand.u32 %v1059, 4294901760
  %1061 = vmatpush1.msra.mxu0 %v1060
  %1062 = vmatprep.subr.mxu0 0.0
  %v1063 = vand.u32 %v551, 4294901760
  %v1064 = vsub.f32 %v551, %v1063
  %v1065 = vand.u32 %v1064, 4294901760
  %1066 = vmatpush1.msra.mxu0 %v1065
  %1067 = vmatprep.subr.mxu0 0.0
  %1068 = vmatpush1.msra.mxu0 0.0
  %1069 = vmatprep.subr.mxu0 0.0
  %1070 = vmatpush1.msra.mxu0 0.0
  %1071 = vmatprep.subr.mxu0 0.0
  %1072 = vmatpush1.msra.mxu0 0.0
  %1073 = vmatprep.subr.mxu0 0.0
  %1074 = vmatpush1.msra.mxu0 0.0
  %1075 = vmatprep.subr.mxu0 0.0
  %1076 = vmatpush1.msra.mxu0 0.0
  %1077 = vmatprep.subr.mxu0 0.0
  %1078 = vmatpush1.msra.mxu0 0.0
  %1079 = vmatprep.subr.mxu0 0.0
  %1080 = vmatpush1.msra.mxu0 0.0
  %1081 = vmatprep.subr.mxu0 0.0
  %1082 = vmatpush1.msra.mxu0 0.0
  %1083 = vmatprep.subr.mxu0 0.0
  %1084 = vmatpush1.msra.mxu0 0.0
  %1085 = vmatprep.subr.mxu0 0.0
  %1086 = vmatpush1.msra.mxu0 0.0
  %1087 = vmatprep.subr.mxu0 0.0
  %1088 = vmatpush1.msra.mxu0 0.0
  %1089 = vmatprep.subr.mxu0 0.0
  %1090 = vmatpush1.msra.mxu0 0.0
  %1091 = vmatprep.subr.mxu0 0.0
  %1092 = vmatpush1.msra.mxu0 0.0
  %1093 = vmatprep.subr.mxu0 0.0
  %1094 = vmatpush1.msra.mxu0 0.0
  %1095 = vmatprep.subr.mxu0 0.0
  %1096 = vmatpush1.msra.mxu0 0.0
  %1097 = vmatprep.subr.mxu0 0.0
  %1098 = vmatpush1.msra.mxu0 0.0
  %1099 = vmatprep.mubr.f32.mxu0 0.0
  %v1100 = vand.u32 %v535, 4294901760
  %1101 = vmatmul.mubr.f32.gmra.mrb[0].mxu0 %v1100
  %v1102 = vpop.f32.mrb[0].mxu0
  %v1103 = vadd.f32 %v984, %v1102
  %v1104 = vpop.f32.mrb[0].mxu0
  %1105 = vdwg.mxu0
  %1106 = vmatprep.subr.mxu0 0.0
  %v1107 = vand.u32 %v536, 4294901760
  %1108 = vmatpush1.msra.mxu0 %v1107
  %1109 = vmatprep.subr.mxu0 0.0
  %v1110 = vand.u32 %v537, 4294901760
  %1111 = vmatpush1.msra.mxu0 %v1110
  %1112 = vmatprep.subr.mxu0 0.0
  %v1113 = vand.u32 %v538, 4294901760
  %1114 = vmatpush1.msra.mxu0 %v1113
  %1115 = vmatprep.subr.mxu0 0.0
  %v1116 = vand.u32 %v539, 4294901760
  %1117 = vmatpush1.msra.mxu0 %v1116
  %1118 = vmatprep.subr.mxu0 0.0
  %v1119 = vand.u32 %v540, 4294901760
  %1120 = vmatpush1.msra.mxu0 %v1119
  %1121 = vmatprep.subr.mxu0 0.0
  %v1122 = vand.u32 %v541, 4294901760
  %1123 = vmatpush1.msra.mxu0 %v1122
  %1124 = vmatprep.subr.mxu0 0.0
  %v1125 = vand.u32 %v542, 4294901760
  %1126 = vmatpush1.msra.mxu0 %v1125
  %1127 = vmatprep.subr.mxu0 0.0
  %v1128 = vand.u32 %v543, 4294901760
  %1129 = vmatpush1.msra.mxu0 %v1128
  %1130 = vmatprep.subr.mxu0 0.0
  %v1131 = vand.u32 %v544, 4294901760
  %1132 = vmatpush1.msra.mxu0 %v1131
  %1133 = vmatprep.subr.mxu0 0.0
  %v1134 = vand.u32 %v545, 4294901760
  %1135 = vmatpush1.msra.mxu0 %v1134
  %1136 = vmatprep.subr.mxu0 0.0
  %v1137 = vand.u32 %v546, 4294901760
  %1138 = vmatpush1.msra.mxu0 %v1137
  %1139 = vmatprep.subr.mxu0 0.0
  %v1140 = vand.u32 %v547, 4294901760
  %1141 = vmatpush1.msra.mxu0 %v1140
  %1142 = vmatprep.subr.mxu0 0.0
  %v1143 = vand.u32 %v548, 4294901760
  %1144 = vmatpush1.msra.mxu0 %v1143
  %1145 = vmatprep.subr.mxu0 0.0
  %v1146 = vand.u32 %v549, 4294901760
  %1147 = vmatpush1.msra.mxu0 %v1146
  %1148 = vmatprep.subr.mxu0 0.0
  %v1149 = vand.u32 %v550, 4294901760
  %1150 = vmatpush1.msra.mxu0 %v1149
  %1151 = vmatprep.subr.mxu0 0.0
  %v1152 = vand.u32 %v551, 4294901760
  %1153 = vmatpush1.msra.mxu0 %v1152
  %1154 = vmatprep.subr.mxu0 0.0
  %1155 = vmatpush1.msra.mxu0 0.0
  %1156 = vmatprep.subr.mxu0 0.0
  %1157 = vmatpush1.msra.mxu0 0.0
  %1158 = vmatprep.subr.mxu0 0.0
  %1159 = vmatpush1.msra.mxu0 0.0
  %1160 = vmatprep.subr.mxu0 0.0
  %1161 = vmatpush1.msra.mxu0 0.0
  %1162 = vmatprep.subr.mxu0 0.0
  %1163 = vmatpush1.msra.mxu0 0.0
  %1164 = vmatprep.subr.mxu0 0.0
  %1165 = vmatpush1.msra.mxu0 0.0
  %1166 = vmatprep.subr.mxu0 0.0
  %1167 = vmatpush1.msra.mxu0 0.0
  %1168 = vmatprep.subr.mxu0 0.0
  %1169 = vmatpush1.msra.mxu0 0.0
  %1170 = vmatprep.subr.mxu0 0.0
  %1171 = vmatpush1.msra.mxu0 0.0
  %1172 = vmatprep.subr.mxu0 0.0
  %1173 = vmatpush1.msra.mxu0 0.0
  %1174 = vmatprep.subr.mxu0 0.0
  %1175 = vmatpush1.msra.mxu0 0.0
  %1176 = vmatprep.subr.mxu0 0.0
  %1177 = vmatpush1.msra.mxu0 0.0
  %1178 = vmatprep.subr.mxu0 0.0
  %1179 = vmatpush1.msra.mxu0 0.0
  %1180 = vmatprep.subr.mxu0 0.0
  %1181 = vmatpush1.msra.mxu0 0.0
  %1182 = vmatprep.subr.mxu0 0.0
  %1183 = vmatpush1.msra.mxu0 0.0
  %1184 = vmatprep.subr.mxu0 0.0
  %1185 = vmatpush1.msra.mxu0 0.0
  %1186 = vmatprep.mubr.f32.mxu0 0.0
  %v1187 = vand.u32 %v535, 4294901760
  %1188 = vmatmul.mubr.f32.gmra.mrb[0].mxu0 %v1187
  %v1189 = vpop.f32.mrb[0].mxu0
  %v1190 = vadd.f32 %v1103, %v1189
  %v1191 = vpop.f32.mrb[0].mxu0
  %1192 = vdwg.mxu0
  %vm1193 = vcmp.lt.s32.totalorder %v524, 16
  %v1194 = vsel %vm1193, %v1190, -1e+30
  %1195 = vmax.xlane.f32.xlu0 %v1194
  %v1196 = vpop.xlane.xlu0 %1195
  %v1197 = vsub.f32 %v1194, %v1196
  %v1198 = vmul.f32 %v1197, 1.442695
  %v1199 = vpow.pop %v1198
  %1200 = vadd.xlane.f32.xlu0 %v1199
  %v1201 = vpop.xlane.xlu0 %1200
  %v1202 = vrcp.pop %v1201
  %v1203 = vmul.f32 %v1199, %v1202
  %vm1204 = vcmp.eq.f32.partialorder %v1194, %v1196
  %v1205 = vsel %vm1204, %v524, 128
  %v1206 = vand.u32 %v1205, 65535
  %v1207 = vshra.s32 %v1205, 16
  %v1208 = vcvt.s32.f32 %v1206
  %v1209 = vcvt.s32.f32 %v1207
  %1210 = vmin.xlane.f32.xlu0 %v1209
  %v1211 = vpop.xlane.xlu0 %1210
  %vm1212 = vcmp.eq.f32.partialorder %v1209, %v1211
  %v1213 = vsel %vm1212, %v1208, inf
  %1214 = vmin.xlane.f32.xlu0 %v1213
  %v1215 = vpop.xlane.xlu0 %1214
  %v1216 = vcvt.f32.s32 %v1215
  %v1217 = vcvt.f32.s32 %v1211
  %v1218 = vshll.u32 %v1217, 16
  %v1219 = vadd.s32 %v1218, %v1216
  %vm1220 = vcmp.eq.s32.totalorder %v524, 16
  %v1221 = vcvt.s32.f32 %v1219
  %v1222 = vsel %vm1220, %v1221, %v1203
  %v1223 = vsel %vm522, 1, 0
  %1224 = vset.pattern.permute.xlu0 1
  %1225 = vperm.xlu0 %1224, %v1223
  %v1226 = vpop.permute.xlu0 %1225
  %vm1227 = vcmp.eq.s32.totalorder %v1226, 1
  %v1228 = vsel %vm1227, %v1222, 0.0
  %1229 = vst [vmem:[%s5] sm:$0xff] %v1228
  // Predicated region
  $region22: #{decision_forward.1} parent=0 // pred_check
    _
  $region23: #{decision_forward.1} parent=0 // pred_check_branch
    %1231 = sbr.rel (0) target = $region25
  $region24: #{decision_forward.1} parent=0 // pred_region
    _
  $region25: #{decision_forward.1} parent=0 // pred_fallthru
    _
  // Predicated region
  $region26: #{decision_forward.1} parent=0 // pred_check
    _
  $region27: #{decision_forward.1} parent=0 // pred_check_branch
    %1233 = sbr.rel (0) target = $region29
  $region28: #{decision_forward.1} parent=0 // pred_region
    _
  $region29: #{decision_forward.1} parent=0 // pred_fallthru
    _

</llo_original>
